<compile_context>
chip_gen: v7x
topology: tpu7x:2x2x1
jax: 0.10.0
libtpu: 0.0.40
codegen_flags: <defaults>
</compile_context>

<pallas_src>
import functools
import math

import jax
import jax.numpy as jnp
from jax.experimental import pallas as pl
from jax.experimental.pallas import tpu as pltpu

LANE = 128  # padded hidden/output feature width (lane-dense -> unmasked vst)


def _round_up(x, m):
    return ((x + m - 1) // m) * m


# ----------------------------------------------------------------------------
# Fused MLP kernel: h = x; for each layer: h = act(h @ W_i + b_i); o = h.
# refs = (x_ref, w1, b1, w2, b2, ..., o_ref); all intermediates stay in
# vregs/VMEM — nothing touches HBM between layers.
# ----------------------------------------------------------------------------
def _fused_mlp_kernel(*refs, activations):
    x_ref = refs[0]
    o_ref = refs[-1]
    wb = refs[1:-1]

    h = x_ref[...].astype(jnp.float32)
    for i, act in enumerate(activations):
        w = wb[2 * i][...]        # bf16 weights (resident across the grid)
        b = wb[2 * i + 1][...]    # f32 bias (1, LANE), broadcasts over rows
        # bf16 operands, f32 accumulation on the MXU.
        h = jnp.dot(h.astype(jnp.bfloat16), w,
                    preferred_element_type=jnp.float32) + b
        if act == "relu":
            h = jnp.maximum(h, 0.0)
        elif act == "sigmoid":
            # exp -> EUP, approx reciprocal -> EUP; keeps the VALU free.
            h = pl.reciprocal(1.0 + jnp.exp(-h), approx=True)
        # act == "none": identity (last encoder layer)
    o_ref[...] = h.astype(o_ref.dtype)


def _resident_spec(shape):
    """Constant-index (resident) block: weights/biases are DMA'd once.
    Request single-buffering (pure VMEM saving); fall back if the kwarg or
    pl.Buffered is unavailable in this JAX version."""
    idx = lambda i: (0,) * len(shape)
    try:
        return pl.BlockSpec(shape, idx, pipeline_mode=pl.Buffered(buffer_count=1))
    except (TypeError, AttributeError):
        return pl.BlockSpec(shape, idx)


# ----------------------------------------------------------------------------
# Wrapper: one fused pallas_call over a batch-tiled 1-D grid.
# Returns the lane-padded (B, 128) output; real logits are out[:, :out_dim]
# (consumers slice/fuse downstream — no extra HBM pass here).
# ----------------------------------------------------------------------------
def autoencoder_forward(x, padded_params, activations, *, tile_b=2048):
    B, Din = x.shape

    # Batch tile: large to amortize per-step overhead, but aim for >=2 grid
    # steps when B allows it so "parallel" shards across both TCs on v7x.
    tb = min(tile_b, max(8, _round_up(pl.cdiv(B, 2), 8)))
    grid = (pl.cdiv(B, tb),)  # partial final block is masked by Pallas

    in_specs = [pl.BlockSpec((tb, Din), lambda i: (i, 0))]  # x un-padded (Din lanes)
    for p in padded_params:
        in_specs.append(_resident_spec(p.shape))

    kernel = functools.partial(_fused_mlp_kernel, activations=tuple(activations))
    return pl.pallas_call(
        kernel,
        out_shape=jax.ShapeDtypeStruct((B, LANE), x.dtype),
        grid=grid,
        in_specs=in_specs,
        out_specs=pl.BlockSpec((tb, LANE), lambda i: (i, 0)),
        compiler_params=pltpu.CompilerParams(
            dimension_semantics=("parallel",),  # shard batch across TCs on v7x
        ),
    )(x, *padded_params)


# ----------------------------------------------------------------------------
# Parameter construction (PyTorch nn.Linear-style uniform init), padded ONCE.
# First layer keeps its real input width (kernel consumes un-padded x); all
# other dims pad to LANE.  Weights stored bf16, biases f32.
# ----------------------------------------------------------------------------
def build_params(key, layer_sizes):
    raw, padded = [], []
    for li, (in_f, out_f) in enumerate(layer_sizes):
        assert out_f <= LANE and (li == 0 or in_f <= LANE)
        key, kw, kb = jax.random.split(key, 3)
        bound = 1.0 / math.sqrt(in_f)
        w = jax.random.uniform(kw, (in_f, out_f), jnp.float32, -bound, bound)
        b = jax.random.uniform(kb, (out_f,), jnp.float32, -bound, bound)
        raw.append((w, b))
        in_pad = in_f if li == 0 else LANE
        wp = jnp.zeros((in_pad, LANE), jnp.bfloat16).at[:in_f, :out_f].set(
            w.astype(jnp.bfloat16))
        bp = jnp.zeros((1, LANE), jnp.float32).at[0, :out_f].set(b)
        padded.extend([wp, bp])
    return raw, padded, key


def make_activations(n_enc, n_dec):
    # encoder: Linear+ReLU per layer, last ReLU popped -> last encoder layer raw
    # decoder: Linear+ReLU per layer, last ReLU popped, Sigmoid appended
    return ["relu"] * (n_enc - 1) + ["none"] + ["relu"] * (n_dec - 1) + ["sigmoid"]


# ----------------------------------------------------------------------------
# Pure-JAX reference (mirrors the PyTorch module); matmul_dtype lets us also
# build a bf16-operand reference to tightly validate the kernel plumbing.
# ----------------------------------------------------------------------------
def reference_forward(x, raw_params, activations, matmul_dtype=jnp.float32):
    h = x
    for (w, b), act in zip(raw_params, activations):
        h = jnp.dot(h.astype(matmul_dtype), w.astype(matmul_dtype),
                    preferred_element_type=jnp.float32) + b
        if act == "relu":
            h = jnp.maximum(h, 0.0)
        elif act == "sigmoid":
            h = jax.nn.sigmoid(h)
    return h


if __name__ == "__main__":
    # Small shapes consistent with the module: MLP autoencoder on flat features.
    batch = 8
    encoder_layers = [(64, 32), (32, 16)]   # 64 -> 32 -> 16 (bottleneck)
    decoder_layers = [(16, 32), (32, 64)]   # 16 -> 32 -> 64, Sigmoid at end
    layer_sizes = encoder_layers + decoder_layers

    key = jax.random.PRNGKey(0)
    key, kx = jax.random.split(key)
    x = jax.random.normal(kx, (batch, encoder_layers[0][0]), jnp.float32)

    raw_params, padded_params, key = build_params(key, layer_sizes)
    activations = make_activations(len(encoder_layers), len(decoder_layers))
    out_dim = decoder_layers[-1][1]

    out_padded = jax.block_until_ready(
        autoencoder_forward(x, padded_params, activations))
    assert out_padded.shape == (batch, LANE)

    # Test-time slice only; the hot path hands the lane-dense buffer downstream.
    out = out_padded[:, :out_dim]

    # Tight check vs a bf16-operand reference (validates kernel plumbing) and a
    # looser check vs the exact f32 PyTorch-style reference (bf16 matmul +
    # approx-EUP sigmoid account for the gap).
    ref_bf16 = jax.block_until_ready(
        reference_forward(x, raw_params, activations, matmul_dtype=jnp.bfloat16))
    ref_f32 = jax.block_until_ready(
        reference_forward(x, raw_params, activations, matmul_dtype=jnp.float32))
    assert bool(jnp.allclose(out, ref_bf16, rtol=2e-3, atol=2e-3)), "mismatch vs bf16 ref"
    assert bool(jnp.allclose(out, ref_f32, rtol=3e-2, atol=3e-2)), "mismatch vs f32 ref"
    print("KERNEL_OK")
</pallas_src>

<mosaic_0001>
module attributes {stable_mosaic.version = 11 : i64} {
  func.func @_fused_mlp_kernel(%arg0: i32, %arg1: memref<8x64xf32, #tpu.memory_space<vmem>>, %arg2: memref<64x128xbf16, #tpu.memory_space<vmem>>, %arg3: memref<1x128xf32, #tpu.memory_space<vmem>>, %arg4: memref<128x128xbf16, #tpu.memory_space<vmem>>, %arg5: memref<1x128xf32, #tpu.memory_space<vmem>>, %arg6: memref<128x128xbf16, #tpu.memory_space<vmem>>, %arg7: memref<1x128xf32, #tpu.memory_space<vmem>>, %arg8: memref<128x128xbf16, #tpu.memory_space<vmem>>, %arg9: memref<1x128xf32, #tpu.memory_space<vmem>>, %arg10: memref<8x128xf32, #tpu.memory_space<vmem>>) attributes {dimension_semantics = [#tpu.dimension_semantics<parallel>], iteration_bounds = array<i64: 1>, scalar_prefetch = 0 : i64, scratch_operands = 0 : i64, tpu.core_type = #tpu.core_type<tc>, window_params = [{transform_indices = @transform_0, window_bounds = array<i64: 8, 64>}, {pipeline_mode = #tpu.pipeline_mode<synchronous>, transform_indices = @transform_1, window_bounds = array<i64: 64, 128>}, {pipeline_mode = #tpu.pipeline_mode<synchronous>, transform_indices = @transform_2, window_bounds = array<i64: 1, 128>}, {pipeline_mode = #tpu.pipeline_mode<synchronous>, transform_indices = @transform_3, window_bounds = array<i64: 128, 128>}, {pipeline_mode = #tpu.pipeline_mode<synchronous>, transform_indices = @transform_4, window_bounds = array<i64: 1, 128>}, {pipeline_mode = #tpu.pipeline_mode<synchronous>, transform_indices = @transform_5, window_bounds = array<i64: 128, 128>}, {pipeline_mode = #tpu.pipeline_mode<synchronous>, transform_indices = @transform_6, window_bounds = array<i64: 1, 128>}, {pipeline_mode = #tpu.pipeline_mode<synchronous>, transform_indices = @transform_7, window_bounds = array<i64: 128, 128>}, {pipeline_mode = #tpu.pipeline_mode<synchronous>, transform_indices = @transform_8, window_bounds = array<i64: 1, 128>}, {transform_indices = @transform_9, window_bounds = array<i64: 8, 128>}]} {
    %c0 = arith.constant 0 : index
    %c0_0 = arith.constant 0 : index
    %0 = vector.load %arg1[%c0, %c0_0] : memref<8x64xf32, #tpu.memory_space<vmem>>, vector<8x64xf32>
    %c0_1 = arith.constant 0 : index
    %c0_2 = arith.constant 0 : index
    %1 = vector.load %arg2[%c0_1, %c0_2] : memref<64x128xbf16, #tpu.memory_space<vmem>>, vector<64x128xbf16>
    %c0_3 = arith.constant 0 : index
    %c0_4 = arith.constant 0 : index
    %2 = vector.load %arg3[%c0_3, %c0_4] : memref<1x128xf32, #tpu.memory_space<vmem>>, vector<1x128xf32>
    %3 = arith.truncf %0 : vector<8x64xf32> to vector<8x64xbf16>
    %cst = arith.constant dense<0.000000e+00> : vector<8x128xf32>
    %4 = tpu.matmul %3, %1, %cst {dimension_numbers = #tpu.dot_dimension_numbers<[1], [0], [0], [1], [0, 0, 1, 1], [], []>} : vector<8x64xbf16>, vector<64x128xbf16>, vector<8x128xf32> -> vector<8x128xf32>
    %5 = vector.broadcast %2 : vector<1x128xf32> to vector<8x128xf32>
    %6 = arith.addf %4, %5 : vector<8x128xf32>
    %cst_5 = arith.constant 0.000000e+00 : f32
    %7 = vector.broadcast %cst_5 : f32 to vector<8x128xf32>
    %8 = arith.maximumf %6, %7 : vector<8x128xf32>
    %c0_6 = arith.constant 0 : index
    %c0_7 = arith.constant 0 : index
    %9 = vector.load %arg4[%c0_6, %c0_7] : memref<128x128xbf16, #tpu.memory_space<vmem>>, vector<128x128xbf16>
    %c0_8 = arith.constant 0 : index
    %c0_9 = arith.constant 0 : index
    %10 = vector.load %arg5[%c0_8, %c0_9] : memref<1x128xf32, #tpu.memory_space<vmem>>, vector<1x128xf32>
    %11 = arith.truncf %8 : vector<8x128xf32> to vector<8x128xbf16>
    %cst_10 = arith.constant dense<0.000000e+00> : vector<8x128xf32>
    %12 = tpu.matmul %11, %9, %cst_10 {dimension_numbers = #tpu.dot_dimension_numbers<[1], [0], [0], [1], [0, 0, 1, 1], [], []>} : vector<8x128xbf16>, vector<128x128xbf16>, vector<8x128xf32> -> vector<8x128xf32>
    %13 = vector.broadcast %10 : vector<1x128xf32> to vector<8x128xf32>
    %14 = arith.addf %12, %13 : vector<8x128xf32>
    %c0_11 = arith.constant 0 : index
    %c0_12 = arith.constant 0 : index
    %15 = vector.load %arg6[%c0_11, %c0_12] : memref<128x128xbf16, #tpu.memory_space<vmem>>, vector<128x128xbf16>
    %c0_13 = arith.constant 0 : index
    %c0_14 = arith.constant 0 : index
    %16 = vector.load %arg7[%c0_13, %c0_14] : memref<1x128xf32, #tpu.memory_space<vmem>>, vector<1x128xf32>
    %17 = arith.truncf %14 : vector<8x128xf32> to vector<8x128xbf16>
    %cst_15 = arith.constant dense<0.000000e+00> : vector<8x128xf32>
    %18 = tpu.matmul %17, %15, %cst_15 {dimension_numbers = #tpu.dot_dimension_numbers<[1], [0], [0], [1], [0, 0, 1, 1], [], []>} : vector<8x128xbf16>, vector<128x128xbf16>, vector<8x128xf32> -> vector<8x128xf32>
    %19 = vector.broadcast %16 : vector<1x128xf32> to vector<8x128xf32>
    %20 = arith.addf %18, %19 : vector<8x128xf32>
    %cst_16 = arith.constant 0.000000e+00 : f32
    %21 = vector.broadcast %cst_16 : f32 to vector<8x128xf32>
    %22 = arith.maximumf %20, %21 : vector<8x128xf32>
    %c0_17 = arith.constant 0 : index
    %c0_18 = arith.constant 0 : index
    %23 = vector.load %arg8[%c0_17, %c0_18] : memref<128x128xbf16, #tpu.memory_space<vmem>>, vector<128x128xbf16>
    %c0_19 = arith.constant 0 : index
    %c0_20 = arith.constant 0 : index
    %24 = vector.load %arg9[%c0_19, %c0_20] : memref<1x128xf32, #tpu.memory_space<vmem>>, vector<1x128xf32>
    %25 = arith.truncf %22 : vector<8x128xf32> to vector<8x128xbf16>
    %cst_21 = arith.constant dense<0.000000e+00> : vector<8x128xf32>
    %26 = tpu.matmul %25, %23, %cst_21 {dimension_numbers = #tpu.dot_dimension_numbers<[1], [0], [0], [1], [0, 0, 1, 1], [], []>} : vector<8x128xbf16>, vector<128x128xbf16>, vector<8x128xf32> -> vector<8x128xf32>
    %27 = vector.broadcast %24 : vector<1x128xf32> to vector<8x128xf32>
    %28 = arith.addf %26, %27 : vector<8x128xf32>
    %cst_22 = arith.constant 0.000000e+00 : f32
    %29 = vector.broadcast %cst_22 : f32 to vector<8x128xf32>
    %30 = arith.subf %29, %28 : vector<8x128xf32>
    %31 = math.exp %30 : vector<8x128xf32>
    %cst_23 = arith.constant 1.000000e+00 : f32
    %32 = vector.broadcast %cst_23 : f32 to vector<8x128xf32>
    %33 = arith.addf %32, %31 : vector<8x128xf32>
    %34 = tpu.reciprocal %33 {approx = true} : vector<8x128xf32> -> vector<8x128xf32>
    %c0_24 = arith.constant 0 : index
    %c0_25 = arith.constant 0 : index
    %35 = vector.load %arg10[%c0_24, %c0_25] : memref<8x128xf32, #tpu.memory_space<vmem>>, vector<8x128xf32>
    tpu.vector_store %arg10[%c0_24, %c0_25], %34 {strides = array<i32>} : memref<8x128xf32, #tpu.memory_space<vmem>>, vector<8x128xf32>,
    return
  }
  func.func @transform_0(%arg0: i32) -> (i32, i32) {
    %c0_i32 = arith.constant 0 : i32
    %c0_i32_0 = arith.constant 0 : i32
    return %arg0, %c0_i32 : i32, i32
  }
  func.func @transform_1(%arg0: i32) -> (i32, i32) {
    %c0_i32 = arith.constant 0 : i32
    %c0_i32_0 = arith.constant 0 : i32
    %c0_i32_1 = arith.constant 0 : i32
    return %c0_i32, %c0_i32_0 : i32, i32
  }
  func.func @transform_2(%arg0: i32) -> (i32, i32) {
    %c0_i32 = arith.constant 0 : i32
    %c0_i32_0 = arith.constant 0 : i32
    %c0_i32_1 = arith.constant 0 : i32
    return %c0_i32, %c0_i32_0 : i32, i32
  }
  func.func @transform_3(%arg0: i32) -> (i32, i32) {
    %c0_i32 = arith.constant 0 : i32
    %c0_i32_0 = arith.constant 0 : i32
    %c0_i32_1 = arith.constant 0 : i32
    return %c0_i32, %c0_i32_0 : i32, i32
  }
  func.func @transform_4(%arg0: i32) -> (i32, i32) {
    %c0_i32 = arith.constant 0 : i32
    %c0_i32_0 = arith.constant 0 : i32
    %c0_i32_1 = arith.constant 0 : i32
    return %c0_i32, %c0_i32_0 : i32, i32
  }
  func.func @transform_5(%arg0: i32) -> (i32, i32) {
    %c0_i32 = arith.constant 0 : i32
    %c0_i32_0 = arith.constant 0 : i32
    %c0_i32_1 = arith.constant 0 : i32
    return %c0_i32, %c0_i32_0 : i32, i32
  }
  func.func @transform_6(%arg0: i32) -> (i32, i32) {
    %c0_i32 = arith.constant 0 : i32
    %c0_i32_0 = arith.constant 0 : i32
    %c0_i32_1 = arith.constant 0 : i32
    return %c0_i32, %c0_i32_0 : i32, i32
  }
  func.func @transform_7(%arg0: i32) -> (i32, i32) {
    %c0_i32 = arith.constant 0 : i32
    %c0_i32_0 = arith.constant 0 : i32
    %c0_i32_1 = arith.constant 0 : i32
    return %c0_i32, %c0_i32_0 : i32, i32
  }
  func.func @transform_8(%arg0: i32) -> (i32, i32) {
    %c0_i32 = arith.constant 0 : i32
    %c0_i32_0 = arith.constant 0 : i32
    %c0_i32_1 = arith.constant 0 : i32
    return %c0_i32, %c0_i32_0 : i32, i32
  }
  func.func @transform_9(%arg0: i32) -> (i32, i32) {
    %c0_i32 = arith.constant 0 : i32
    %c0_i32_0 = arith.constant 0 : i32
    return %arg0, %c0_i32 : i32, i32
  }
}

</mosaic_0001>

<llo_original>
// kernel: tpu_custom_call.1
$region0: #{tpu_custom_call.1}
  #allocation0 [shape = 'u32[]', space=smem, size = 0x4, offset = 0x4, fixed_abs, tag = 'smem constant byte address 0x4 - core index']
  #allocation1 [shape = 'u32[144,128]{1,0:T(1,128)}', space=vmem, size = 0x12000, scoped, tag = 'internal scratch']
  %s0 = inlined_call_operand.hbm [shape: f32[8,64], index: 0, kind: input, shape index: {}]
  %s1 = inlined_call_operand.hbm [shape: bf16[64,128], index: 1, kind: input, shape index: {}]
  %s2 = inlined_call_operand.vmem [shape: f32[1,128], index: 2, kind: input, shape index: {}]
  %s3 = inlined_call_operand.hbm [shape: bf16[128,128], index: 3, kind: input, shape index: {}]
  %s4 = inlined_call_operand.vmem [shape: f32[1,128], index: 4, kind: input, shape index: {}]
  %s5 = inlined_call_operand.hbm [shape: bf16[128,128], index: 5, kind: input, shape index: {}]
  %s6 = inlined_call_operand.vmem [shape: f32[1,128], index: 6, kind: input, shape index: {}]
  %s7 = inlined_call_operand.hbm [shape: bf16[128,128], index: 7, kind: input, shape index: {}]
  %s8 = inlined_call_operand.vmem [shape: f32[1,128], index: 8, kind: input, shape index: {}]
  %s9 = inlined_call_operand.hbm [shape: f32[8,128], index: 9, kind: output, shape index: {}]
  %s10 = sld [smem:[#allocation0]]
  $region66: #{tpu_custom_call.1} parent=0
    _
  %s12 = ssub.s32 1, %s10
  %s13 = scalar_select 0, %s12, %s10
  $region1: #{tpu_custom_call.1} parent=0
    #allocation2 [shape = 'u8[4096]{0}', space=vmem, size = 0x1000, scoped, tag = 'input window, operand 0, single buffered']
    #allocation3 [shape = 's32[1]{0}', space=sflag, size = 0x4, scoped, tag = 'scoped memory for tpu_custom_call.1']
    #allocation4 [shape = 's32[1]{0}', space=sflag, size = 0x4, scoped, tag = 'scoped memory for tpu_custom_call.1']
    #allocation5 [shape = 'u8[16384]{0}', space=vmem, size = 0x4000, scoped, tag = 'input window, operand 1, single buffered']
    #allocation6 [shape = 's32[1]{0}', space=sflag, size = 0x4, scoped, tag = 'scoped memory for tpu_custom_call.1']
    #allocation7 [shape = 'u8[32768]{0}', space=vmem, size = 0x8000, scoped, tag = 'input window, operand 3, single buffered']
    #allocation8 [shape = 'u8[32768]{0}', space=vmem, size = 0x8000, scoped, tag = 'input window, operand 5, single buffered']
    #allocation9 [shape = 's32[1]{0}', space=sflag, size = 0x4, scoped, tag = 'scoped memory for tpu_custom_call.1']
    #allocation10 [shape = 'u8[32768]{0}', space=vmem, size = 0x8000, scoped, tag = 'input window, operand 7, single buffered']
    #allocation11 [shape = 'u8[4096]{0}', space=vmem, size = 0x1000, scoped, tag = 'output window, operand 0, single buffered']
    %14 = vsyncpa [#allocation3], 0
    %15 = vsyncpa [#allocation6], 0
    %16 = vsyncpa [#allocation9], 0
    %17 = vsyncpa [#allocation4], 0
    // Predicated region
    $region2: #{tpu_custom_call.1} parent=1 // pred_check
      _
    $region3: #{tpu_custom_call.1} parent=1 // pred_check_branch
      %19 = sbr.rel (0) target = $region5
    $region4: #{tpu_custom_call.1} parent=1 // pred_region
      %s21 = ssub.s32 128, 128
      %22 = vsyncadd [#allocation3], %s21
      %s24 = sshll.u32 [#allocation2], 4
      %s25 = int_to_ptr.vmem [resolvable:$true] %s24
      %27 = dma.hbm_to_vmem [thread:$0]  %s0, 128, %s25, [#allocation3]
    $region5: #{tpu_custom_call.1} parent=1 // pred_fallthru
      _
    // Predicated region
    $region6: #{tpu_custom_call.1} parent=1 // pred_check
      _
    $region7: #{tpu_custom_call.1} parent=1 // pred_check_branch
      %29 = sbr.rel (0) target = $region9
    $region8: #{tpu_custom_call.1} parent=1 // pred_region
      %s31 = ssub.s32 512, 512
      %32 = vsyncadd [#allocation6], %s31
      %s33 = sshll.u32 [#allocation5], 4
      %s34 = int_to_ptr.vmem [resolvable:$true] %s33
      %39 = dma.hbm_to_vmem [thread:$0]  %s1, 512, %s34, [#allocation6], 64, 64, 4
    $region9: #{tpu_custom_call.1} parent=1 // pred_fallthru
      _
    // Predicated region
    $region10: #{tpu_custom_call.1} parent=1 // pred_check
      _
    $region11: #{tpu_custom_call.1} parent=1 // pred_check_branch
      %41 = sbr.rel (0) target = $region13
    $region12: #{tpu_custom_call.1} parent=1 // pred_region
      _
    $region13: #{tpu_custom_call.1} parent=1 // pred_fallthru
      _
    // Predicated region
    $region14: #{tpu_custom_call.1} parent=1 // pred_check
      _
    $region15: #{tpu_custom_call.1} parent=1 // pred_check_branch
      %43 = sbr.rel (0) target = $region17
    $region16: #{tpu_custom_call.1} parent=1 // pred_region
      %s45 = ssub.s32 1024, 1024
      %46 = vsyncadd [#allocation6], %s45
      %s47 = sshll.u32 [#allocation7], 4
      %s48 = int_to_ptr.vmem [resolvable:$true] %s47
      %53 = dma.hbm_to_vmem [thread:$0]  %s3, 1024, %s48, [#allocation6], 64, 64, 4
    $region17: #{tpu_custom_call.1} parent=1 // pred_fallthru
      _
    // Predicated region
    $region18: #{tpu_custom_call.1} parent=1 // pred_check
      _
    $region19: #{tpu_custom_call.1} parent=1 // pred_check_branch
      %55 = sbr.rel (0) target = $region21
    $region20: #{tpu_custom_call.1} parent=1 // pred_region
      _
    $region21: #{tpu_custom_call.1} parent=1 // pred_fallthru
      _
    // Predicated region
    $region22: #{tpu_custom_call.1} parent=1 // pred_check
      _
    $region23: #{tpu_custom_call.1} parent=1 // pred_check_branch
      %57 = sbr.rel (0) target = $region25
    $region24: #{tpu_custom_call.1} parent=1 // pred_region
      %s59 = ssub.s32 1024, 1024
      %60 = vsyncadd [#allocation9], %s59
      %s61 = sshll.u32 [#allocation8], 4
      %s62 = int_to_ptr.vmem [resolvable:$true] %s61
      %67 = dma.hbm_to_vmem [thread:$0]  %s5, 1024, %s62, [#allocation9], 64, 64, 4
    $region25: #{tpu_custom_call.1} parent=1 // pred_fallthru
      _
    // Predicated region
    $region26: #{tpu_custom_call.1} parent=1 // pred_check
      _
    $region27: #{tpu_custom_call.1} parent=1 // pred_check_branch
      %69 = sbr.rel (0) target = $region29
    $region28: #{tpu_custom_call.1} parent=1 // pred_region
      _
    $region29: #{tpu_custom_call.1} parent=1 // pred_fallthru
      _
    // Predicated region
    $region30: #{tpu_custom_call.1} parent=1 // pred_check
      _
    $region31: #{tpu_custom_call.1} parent=1 // pred_check_branch
      %71 = sbr.rel (0) target = $region33
    $region32: #{tpu_custom_call.1} parent=1 // pred_region
      %s73 = ssub.s32 1024, 1024
      %74 = vsyncadd [#allocation9], %s73
      %s75 = sshll.u32 [#allocation10], 4
      %s76 = int_to_ptr.vmem [resolvable:$true] %s75
      %81 = dma.hbm_to_vmem [thread:$0]  %s7, 1024, %s76, [#allocation9], 64, 64, 4
    $region33: #{tpu_custom_call.1} parent=1 // pred_fallthru
      _
    // Predicated region
    $region34: #{tpu_custom_call.1} parent=1 // pred_check
      _
    $region35: #{tpu_custom_call.1} parent=1 // pred_check_branch
      %83 = sbr.rel (0) target = $region37
    $region36: #{tpu_custom_call.1} parent=1 // pred_region
      _
    $region37: #{tpu_custom_call.1} parent=1 // pred_fallthru
      _
    // Predicated region
    $region38: #{tpu_custom_call.1} parent=1 // pred_check
      _
    $region39: #{tpu_custom_call.1} parent=1 // pred_check_branch
      %85 = sbr.rel (0) target = $region41
    $region40: #{tpu_custom_call.1} parent=1 // pred_region
      %86 = dma.done [#allocation3], 128
    $region41: #{tpu_custom_call.1} parent=1 // pred_fallthru
      _
    // Predicated region
    $region42: #{tpu_custom_call.1} parent=1 // pred_check
      _
    $region43: #{tpu_custom_call.1} parent=1 // pred_check_branch
      %88 = sbr.rel (0) target = $region45
    $region44: #{tpu_custom_call.1} parent=1 // pred_region
      %89 = dma.done [#allocation6], 512
    $region45: #{tpu_custom_call.1} parent=1 // pred_fallthru
      _
    // Predicated region
    $region46: #{tpu_custom_call.1} parent=1 // pred_check
      _
    $region47: #{tpu_custom_call.1} parent=1 // pred_check_branch
      %91 = sbr.rel (0) target = $region49
    $region48: #{tpu_custom_call.1} parent=1 // pred_region
      %92 = dma.done [#allocation6], 1024
    $region49: #{tpu_custom_call.1} parent=1 // pred_fallthru
      _
    // Predicated region
    $region50: #{tpu_custom_call.1} parent=1 // pred_check
      _
    $region51: #{tpu_custom_call.1} parent=1 // pred_check_branch
      %94 = sbr.rel (0) target = $region53
    $region52: #{tpu_custom_call.1} parent=1 // pred_region
      %95 = dma.done [#allocation9], 1024
    $region53: #{tpu_custom_call.1} parent=1 // pred_fallthru
      _
    // Predicated region
    $region54: #{tpu_custom_call.1} parent=1 // pred_check
      _
    $region55: #{tpu_custom_call.1} parent=1 // pred_check_branch
      %97 = sbr.rel (0) target = $region57
    $region56: #{tpu_custom_call.1} parent=1 // pred_region
      %98 = dma.done [#allocation9], 1024
    $region57: #{tpu_custom_call.1} parent=1 // pred_fallthru
      _
    %v100 = vld [vmem:[#allocation2] sm:$0xff]
    %v101 = vld [vmem:[#allocation5] sm:$0xf]
    %v102 = vld [vmem:[#allocation5 + $0x4] sm:$0xf]
    %v103 = vld [vmem:[#allocation5 + $0x8] sm:$0xf]
    %v104 = vld [vmem:[#allocation5 + $0xc] sm:$0xf]
    %v105 = vld [vmem:[#allocation5 + $0x10] sm:$0xf]
    %v106 = vld [vmem:[#allocation5 + $0x14] sm:$0xf]
    %v107 = vld [vmem:[#allocation5 + $0x18] sm:$0xf]
    %v108 = vld [vmem:[#allocation5 + $0x1c] sm:$0xf]
    %v109 = vld [vmem:[%s2] sm:$0x1]
    %v110 = vpack.c.bf16 %v100, %v100
    %v112 = vlaneseq
    %v113 = vshrl.u32 %v112, 7
    %v114 = vsub.s32 0, %v113
    %v115 = vrot.slane %v109, %v114
    %v125 = vunpack.c.l.b16 %v101
    %v126 = vunpack.c.l.b16 %v102
    %v127 = vunpack.c.l.b16 %v103
    %v128 = vunpack.c.l.b16 %v104
    %v129 = vunpack.c.l.b16 %v105
    %v130 = vunpack.c.l.b16 %v106
    %v131 = vunpack.c.l.b16 %v107
    %v132 = vunpack.c.l.b16 %v108
    %v133 = vpack.c.b16 %v126, %v125
    %v134 = vpack.c.b16 %v128, %v127
    %v135 = vpack.c.b16 %v130, %v129
    %v136 = vpack.c.b16 %v132, %v131
    %vm141 = vcmask 523264
    %v143 = vsel %vm141, %v110, 0
    %145 = vmatprep.subr.bf16.mxu0 0
    %146 = vmatpush1.bf16.msra.mxu0 %v133
    %147 = vmatprep.subr.bf16.mxu0 0
    %148 = vmatpush1.bf16.msra.mxu0 %v134
    %149 = vmatprep.subr.bf16.mxu0 0
    %150 = vmatpush1.bf16.msra.mxu0 %v135
    %151 = vmatprep.subr.bf16.mxu0 0
    %152 = vmatpush1.bf16.msra.mxu0 %v136
    %153 = vmatprep.subr.bf16.mxu0 0
    %154 = vmatpush1.bf16.msra.mxu0 0
    %155 = vmatprep.subr.bf16.mxu0 0
    %156 = vmatpush1.bf16.msra.mxu0 0
    %157 = vmatprep.subr.bf16.mxu0 0
    %158 = vmatpush1.bf16.msra.mxu0 0
    %159 = vmatprep.subr.bf16.mxu0 0
    %160 = vmatpush1.bf16.msra.mxu0 0
    %161 = vmatprep.subr.bf16.mxu0 0
    %162 = vmatpush1.bf16.msra.mxu0 0
    %163 = vmatprep.subr.bf16.mxu0 0
    %164 = vmatpush1.bf16.msra.mxu0 0
    %165 = vmatprep.subr.bf16.mxu0 0
    %166 = vmatpush1.bf16.msra.mxu0 0
    %167 = vmatprep.subr.bf16.mxu0 0
    %168 = vmatpush1.bf16.msra.mxu0 0
    %169 = vmatprep.subr.bf16.mxu0 0
    %170 = vmatpush1.bf16.msra.mxu0 0
    %171 = vmatprep.subr.bf16.mxu0 0
    %172 = vmatpush1.bf16.msra.mxu0 0
    %173 = vmatprep.subr.bf16.mxu0 0
    %174 = vmatpush1.bf16.msra.mxu0 0
    %175 = vmatprep.subr.bf16.mxu0 0
    %176 = vmatpush1.bf16.msra.mxu0 0
    %177 = vmatprep.mubr.bf16.mxu0 0
    %178 = vmatmul.mubr.bf16.gmra.mrb[0].mxu0 %v143
    %v179 = vpop.f32.mrb[0].mxu0
    %v180 = vadd.f32 %v115, %v179
    %v181 = vpop.f32.mrb[0].mxu0
    %v182 = vpop.f32.mrb[0].mxu0
    %v183 = vpop.f32.mrb[0].mxu0
    %184 = vdwg.mxu0
    %v185 = vmax.f32 %v180, 0.0
    %v186 = vld [vmem:[#allocation7] sm:$0xf]
    %v187 = vld [vmem:[#allocation7 + $0x4] sm:$0xf]
    %v188 = vld [vmem:[#allocation7 + $0x8] sm:$0xf]
    %v189 = vld [vmem:[#allocation7 + $0xc] sm:$0xf]
    %v190 = vld [vmem:[#allocation7 + $0x10] sm:$0xf]
    %v191 = vld [vmem:[#allocation7 + $0x14] sm:$0xf]
    %v192 = vld [vmem:[#allocation7 + $0x18] sm:$0xf]
    %v193 = vld [vmem:[#allocation7 + $0x1c] sm:$0xf]
    %v194 = vld [vmem:[#allocation7 + $0x20] sm:$0xf]
    %v195 = vld [vmem:[#allocation7 + $0x24] sm:$0xf]
    %v196 = vld [vmem:[#allocation7 + $0x28] sm:$0xf]
    %v197 = vld [vmem:[#allocation7 + $0x2c] sm:$0xf]
    %v198 = vld [vmem:[#allocation7 + $0x30] sm:$0xf]
    %v199 = vld [vmem:[#allocation7 + $0x34] sm:$0xf]
    %v200 = vld [vmem:[#allocation7 + $0x38] sm:$0xf]
    %v201 = vld [vmem:[#allocation7 + $0x3c] sm:$0xf]
    %v202 = vld [vmem:[%s4] sm:$0x1]
    %v203 = vpack.c.bf16 %v185, %v185
    %v205 = vlaneseq
    %v206 = vshrl.u32 %v205, 7
    %v207 = vsub.s32 0, %v206
    %v208 = vrot.slane %v202, %v207
    %v226 = vunpack.c.l.b16 %v186
    %v227 = vunpack.c.l.b16 %v187
    %v228 = vunpack.c.l.b16 %v188
    %v229 = vunpack.c.l.b16 %v189
    %v230 = vunpack.c.l.b16 %v190
    %v231 = vunpack.c.l.b16 %v191
    %v232 = vunpack.c.l.b16 %v192
    %v233 = vunpack.c.l.b16 %v193
    %v234 = vunpack.c.l.b16 %v194
    %v235 = vunpack.c.l.b16 %v195
    %v236 = vunpack.c.l.b16 %v196
    %v237 = vunpack.c.l.b16 %v197
    %v238 = vunpack.c.l.b16 %v198
    %v239 = vunpack.c.l.b16 %v199
    %v240 = vunpack.c.l.b16 %v200
    %v241 = vunpack.c.l.b16 %v201
    %v242 = vpack.c.b16 %v227, %v226
    %v243 = vpack.c.b16 %v229, %v228
    %v244 = vpack.c.b16 %v231, %v230
    %v245 = vpack.c.b16 %v233, %v232
    %v246 = vpack.c.b16 %v235, %v234
    %v247 = vpack.c.b16 %v237, %v236
    %v248 = vpack.c.b16 %v239, %v238
    %v249 = vpack.c.b16 %v241, %v240
    %258 = vmatprep.subr.bf16.mxu0 0
    %259 = vmatpush1.bf16.msra.mxu0 %v242
    %260 = vmatprep.subr.bf16.mxu0 0
    %261 = vmatpush1.bf16.msra.mxu0 %v243
    %262 = vmatprep.subr.bf16.mxu0 0
    %263 = vmatpush1.bf16.msra.mxu0 %v244
    %264 = vmatprep.subr.bf16.mxu0 0
    %265 = vmatpush1.bf16.msra.mxu0 %v245
    %266 = vmatprep.subr.bf16.mxu0 0
    %267 = vmatpush1.bf16.msra.mxu0 %v246
    %268 = vmatprep.subr.bf16.mxu0 0
    %269 = vmatpush1.bf16.msra.mxu0 %v247
    %270 = vmatprep.subr.bf16.mxu0 0
    %271 = vmatpush1.bf16.msra.mxu0 %v248
    %272 = vmatprep.subr.bf16.mxu0 0
    %273 = vmatpush1.bf16.msra.mxu0 %v249
    %274 = vmatprep.subr.bf16.mxu0 0
    %275 = vmatpush1.bf16.msra.mxu0 0
    %276 = vmatprep.subr.bf16.mxu0 0
    %277 = vmatpush1.bf16.msra.mxu0 0
    %278 = vmatprep.subr.bf16.mxu0 0
    %279 = vmatpush1.bf16.msra.mxu0 0
    %280 = vmatprep.subr.bf16.mxu0 0
    %281 = vmatpush1.bf16.msra.mxu0 0
    %282 = vmatprep.subr.bf16.mxu0 0
    %283 = vmatpush1.bf16.msra.mxu0 0
    %284 = vmatprep.subr.bf16.mxu0 0
    %285 = vmatpush1.bf16.msra.mxu0 0
    %286 = vmatprep.subr.bf16.mxu0 0
    %287 = vmatpush1.bf16.msra.mxu0 0
    %288 = vmatprep.subr.bf16.mxu0 0
    %289 = vmatpush1.bf16.msra.mxu0 0
    %290 = vmatprep.mubr.bf16.mxu0 0
    %291 = vmatmul.mubr.bf16.gmra.mrb[0].mxu0 %v203
    %v292 = vpop.f32.mrb[0].mxu0
    %v293 = vadd.f32 %v208, %v292
    %v294 = vpop.f32.mrb[0].mxu0
    %v295 = vpop.f32.mrb[0].mxu0
    %v296 = vpop.f32.mrb[0].mxu0
    %297 = vdwg.mxu0
    %v298 = vld [vmem:[#allocation8] sm:$0xf]
    %v299 = vld [vmem:[#allocation8 + $0x4] sm:$0xf]
    %v300 = vld [vmem:[#allocation8 + $0x8] sm:$0xf]
    %v301 = vld [vmem:[#allocation8 + $0xc] sm:$0xf]
    %v302 = vld [vmem:[#allocation8 + $0x10] sm:$0xf]
    %v303 = vld [vmem:[#allocation8 + $0x14] sm:$0xf]
    %v304 = vld [vmem:[#allocation8 + $0x18] sm:$0xf]
    %v305 = vld [vmem:[#allocation8 + $0x1c] sm:$0xf]
    %v306 = vld [vmem:[#allocation8 + $0x20] sm:$0xf]
    %v307 = vld [vmem:[#allocation8 + $0x24] sm:$0xf]
    %v308 = vld [vmem:[#allocation8 + $0x28] sm:$0xf]
    %v309 = vld [vmem:[#allocation8 + $0x2c] sm:$0xf]
    %v310 = vld [vmem:[#allocation8 + $0x30] sm:$0xf]
    %v311 = vld [vmem:[#allocation8 + $0x34] sm:$0xf]
    %v312 = vld [vmem:[#allocation8 + $0x38] sm:$0xf]
    %v313 = vld [vmem:[#allocation8 + $0x3c] sm:$0xf]
    %v314 = vld [vmem:[%s6] sm:$0x1]
    %v315 = vpack.c.bf16 %v293, %v293
    %v317 = vlaneseq
    %v318 = vshrl.u32 %v317, 7
    %v319 = vsub.s32 0, %v318
    %v320 = vrot.slane %v314, %v319
    %v338 = vunpack.c.l.b16 %v298
    %v339 = vunpack.c.l.b16 %v299
    %v340 = vunpack.c.l.b16 %v300
    %v341 = vunpack.c.l.b16 %v301
    %v342 = vunpack.c.l.b16 %v302
    %v343 = vunpack.c.l.b16 %v303
    %v344 = vunpack.c.l.b16 %v304
    %v345 = vunpack.c.l.b16 %v305
    %v346 = vunpack.c.l.b16 %v306
    %v347 = vunpack.c.l.b16 %v307
    %v348 = vunpack.c.l.b16 %v308
    %v349 = vunpack.c.l.b16 %v309
    %v350 = vunpack.c.l.b16 %v310
    %v351 = vunpack.c.l.b16 %v311
    %v352 = vunpack.c.l.b16 %v312
    %v353 = vunpack.c.l.b16 %v313
    %v354 = vpack.c.b16 %v339, %v338
    %v355 = vpack.c.b16 %v341, %v340
    %v356 = vpack.c.b16 %v343, %v342
    %v357 = vpack.c.b16 %v345, %v344
    %v358 = vpack.c.b16 %v347, %v346
    %v359 = vpack.c.b16 %v349, %v348
    %v360 = vpack.c.b16 %v351, %v350
    %v361 = vpack.c.b16 %v353, %v352
    %370 = vmatprep.subr.bf16.mxu0 0
    %371 = vmatpush1.bf16.msra.mxu0 %v354
    %372 = vmatprep.subr.bf16.mxu0 0
    %373 = vmatpush1.bf16.msra.mxu0 %v355
    %374 = vmatprep.subr.bf16.mxu0 0
    %375 = vmatpush1.bf16.msra.mxu0 %v356
    %376 = vmatprep.subr.bf16.mxu0 0
    %377 = vmatpush1.bf16.msra.mxu0 %v357
    %378 = vmatprep.subr.bf16.mxu0 0
    %379 = vmatpush1.bf16.msra.mxu0 %v358
    %380 = vmatprep.subr.bf16.mxu0 0
    %381 = vmatpush1.bf16.msra.mxu0 %v359
    %382 = vmatprep.subr.bf16.mxu0 0
    %383 = vmatpush1.bf16.msra.mxu0 %v360
    %384 = vmatprep.subr.bf16.mxu0 0
    %385 = vmatpush1.bf16.msra.mxu0 %v361
    %386 = vmatprep.subr.bf16.mxu0 0
    %387 = vmatpush1.bf16.msra.mxu0 0
    %388 = vmatprep.subr.bf16.mxu0 0
    %389 = vmatpush1.bf16.msra.mxu0 0
    %390 = vmatprep.subr.bf16.mxu0 0
    %391 = vmatpush1.bf16.msra.mxu0 0
    %392 = vmatprep.subr.bf16.mxu0 0
    %393 = vmatpush1.bf16.msra.mxu0 0
    %394 = vmatprep.subr.bf16.mxu0 0
    %395 = vmatpush1.bf16.msra.mxu0 0
    %396 = vmatprep.subr.bf16.mxu0 0
    %397 = vmatpush1.bf16.msra.mxu0 0
    %398 = vmatprep.subr.bf16.mxu0 0
    %399 = vmatpush1.bf16.msra.mxu0 0
    %400 = vmatprep.subr.bf16.mxu0 0
    %401 = vmatpush1.bf16.msra.mxu0 0
    %402 = vmatprep.mubr.bf16.mxu0 0
    %403 = vmatmul.mubr.bf16.gmra.mrb[0].mxu0 %v315
    %v404 = vpop.f32.mrb[0].mxu0
    %v405 = vadd.f32 %v320, %v404
    %v406 = vpop.f32.mrb[0].mxu0
    %v407 = vpop.f32.mrb[0].mxu0
    %v408 = vpop.f32.mrb[0].mxu0
    %409 = vdwg.mxu0
    %v410 = vmax.f32 %v405, 0.0
    %v411 = vld [vmem:[#allocation10] sm:$0xf]
    %v412 = vld [vmem:[#allocation10 + $0x4] sm:$0xf]
    %v413 = vld [vmem:[#allocation10 + $0x8] sm:$0xf]
    %v414 = vld [vmem:[#allocation10 + $0xc] sm:$0xf]
    %v415 = vld [vmem:[#allocation10 + $0x10] sm:$0xf]
    %v416 = vld [vmem:[#allocation10 + $0x14] sm:$0xf]
    %v417 = vld [vmem:[#allocation10 + $0x18] sm:$0xf]
    %v418 = vld [vmem:[#allocation10 + $0x1c] sm:$0xf]
    %v419 = vld [vmem:[#allocation10 + $0x20] sm:$0xf]
    %v420 = vld [vmem:[#allocation10 + $0x24] sm:$0xf]
    %v421 = vld [vmem:[#allocation10 + $0x28] sm:$0xf]
    %v422 = vld [vmem:[#allocation10 + $0x2c] sm:$0xf]
    %v423 = vld [vmem:[#allocation10 + $0x30] sm:$0xf]
    %v424 = vld [vmem:[#allocation10 + $0x34] sm:$0xf]
    %v425 = vld [vmem:[#allocation10 + $0x38] sm:$0xf]
    %v426 = vld [vmem:[#allocation10 + $0x3c] sm:$0xf]
    %v427 = vld [vmem:[%s8] sm:$0x1]
    %v428 = vpack.c.bf16 %v410, %v410
    %v430 = vlaneseq
    %v431 = vshrl.u32 %v430, 7
    %v432 = vsub.s32 0, %v431
    %v433 = vrot.slane %v427, %v432
    %v451 = vunpack.c.l.b16 %v411
    %v452 = vunpack.c.l.b16 %v412
    %v453 = vunpack.c.l.b16 %v413
    %v454 = vunpack.c.l.b16 %v414
    %v455 = vunpack.c.l.b16 %v415
    %v456 = vunpack.c.l.b16 %v416
    %v457 = vunpack.c.l.b16 %v417
    %v458 = vunpack.c.l.b16 %v418
    %v459 = vunpack.c.l.b16 %v419
    %v460 = vunpack.c.l.b16 %v420
    %v461 = vunpack.c.l.b16 %v421
    %v462 = vunpack.c.l.b16 %v422
    %v463 = vunpack.c.l.b16 %v423
    %v464 = vunpack.c.l.b16 %v424
    %v465 = vunpack.c.l.b16 %v425
    %v466 = vunpack.c.l.b16 %v426
    %v467 = vpack.c.b16 %v452, %v451
    %v468 = vpack.c.b16 %v454, %v453
    %v469 = vpack.c.b16 %v456, %v455
    %v470 = vpack.c.b16 %v458, %v457
    %v471 = vpack.c.b16 %v460, %v459
    %v472 = vpack.c.b16 %v462, %v461
    %v473 = vpack.c.b16 %v464, %v463
    %v474 = vpack.c.b16 %v466, %v465
    %483 = vmatprep.subr.bf16.mxu0 0
    %484 = vmatpush1.bf16.msra.mxu0 %v467
    %485 = vmatprep.subr.bf16.mxu0 0
    %486 = vmatpush1.bf16.msra.mxu0 %v468
    %487 = vmatprep.subr.bf16.mxu0 0
    %488 = vmatpush1.bf16.msra.mxu0 %v469
    %489 = vmatprep.subr.bf16.mxu0 0
    %490 = vmatpush1.bf16.msra.mxu0 %v470
    %491 = vmatprep.subr.bf16.mxu0 0
    %492 = vmatpush1.bf16.msra.mxu0 %v471
    %493 = vmatprep.subr.bf16.mxu0 0
    %494 = vmatpush1.bf16.msra.mxu0 %v472
    %495 = vmatprep.subr.bf16.mxu0 0
    %496 = vmatpush1.bf16.msra.mxu0 %v473
    %497 = vmatprep.subr.bf16.mxu0 0
    %498 = vmatpush1.bf16.msra.mxu0 %v474
    %499 = vmatprep.subr.bf16.mxu0 0
    %500 = vmatpush1.bf16.msra.mxu0 0
    %501 = vmatprep.subr.bf16.mxu0 0
    %502 = vmatpush1.bf16.msra.mxu0 0
    %503 = vmatprep.subr.bf16.mxu0 0
    %504 = vmatpush1.bf16.msra.mxu0 0
    %505 = vmatprep.subr.bf16.mxu0 0
    %506 = vmatpush1.bf16.msra.mxu0 0
    %507 = vmatprep.subr.bf16.mxu0 0
    %508 = vmatpush1.bf16.msra.mxu0 0
    %509 = vmatprep.subr.bf16.mxu0 0
    %510 = vmatpush1.bf16.msra.mxu0 0
    %511 = vmatprep.subr.bf16.mxu0 0
    %512 = vmatpush1.bf16.msra.mxu0 0
    %513 = vmatprep.subr.bf16.mxu0 0
    %514 = vmatpush1.bf16.msra.mxu0 0
    %515 = vmatprep.mubr.bf16.mxu0 0
    %516 = vmatmul.mubr.bf16.gmra.mrb[0].mxu0 %v428
    %v517 = vpop.f32.mrb[0].mxu0
    %v518 = vadd.f32 %v433, %v517
    %v519 = vpop.f32.mrb[0].mxu0
    %v520 = vpop.f32.mrb[0].mxu0
    %v521 = vpop.f32.mrb[0].mxu0
    %522 = vdwg.mxu0
    %v523 = vsub.f32 0.0, %v518
    %v524 = vmul.f32 %v523, 1.442695
    %v525 = vpow.pop %v524
    %v526 = vadd.f32 %v525, 1.0
    %v527 = vrcp.pop %v526
    %528 = vst [vmem:[#allocation11] sm:$0xff] %v527
    // Predicated region
    $region58: #{tpu_custom_call.1} parent=1 // pred_check
      _
    $region59: #{tpu_custom_call.1} parent=1 // pred_check_branch
      %530 = sbr.rel (0) target = $region61
    $region60: #{tpu_custom_call.1} parent=1 // pred_region
      %s532 = ssub.s32 128, 128
      %533 = vsyncadd [#allocation4], %s532
      %s535 = sshll.u32 [#allocation11], 4
      %s536 = int_to_ptr.vmem [resolvable:$true] %s535
      %538 = dma.vmem_to_hbm [thread:$0]  %s536, 128, %s9, [#allocation4]
    $region61: #{tpu_custom_call.1} parent=1 // pred_fallthru
      _
    // Predicated region
    $region62: #{tpu_custom_call.1} parent=1 // pred_check
      _
    $region63: #{tpu_custom_call.1} parent=1 // pred_check_branch
      %540 = sbr.rel (0) target = $region65
    $region64: #{tpu_custom_call.1} parent=1 // pred_region
      %541 = dma.done [#allocation4], 128
    $region65: #{tpu_custom_call.1} parent=1 // pred_fallthru
      _
    %542 = vsyncpa [#allocation3], 1
    %543 = vsyncpa [#allocation6], 1
    %544 = vsyncpa [#allocation9], 1
    %545 = vsyncpa [#allocation4], 1

</llo_original>
